<compile_context>
chip_gen: v5e
topology: v5e:2x2
jax: 0.10.0
libtpu: 0.0.40
codegen_flags: <defaults>
</compile_context>

<pallas_src>
import functools

import jax
import jax.numpy as jnp
from jax.experimental import pallas as pl
from jax.experimental.pallas import tpu as pltpu


def _round_up(x: int, m: int) -> int:
    return ((x + m - 1) // m) * m


def _mlp_kernel(*refs, num_layers: int):
    """Fused MLP over one batch tile.

    refs layout: x_ref, (w0, b0, ..., w_{L-1}, b_{L-1}), out_ref
      x_ref  : (TB, F)            input features (f32 or bf16)
      w_l    : (Kp_l, PACK) bf16  zero-padded, column-shifted so layer l's outputs land
                                  in lanes [off_l, off_l+N_l); rows shifted to match the
                                  lane range of the previous layer's outputs.
      b_l    : (1, PACK)    f32   zero-padded / shifted the same way
      out_ref: (TB, PACK)   f32   packed pre-activations of ALL layers (disjoint lanes)
    """
    x_ref = refs[0]
    wb_refs = refs[1:1 + 2 * num_layers]
    out_ref = refs[1 + 2 * num_layers]

    act = x_ref[...].astype(jnp.bfloat16)          # bf16 MXU operand; stays in vregs/VMEM
    packed = None
    for l in range(num_layers):
        w = wb_refs[2 * l][...]
        b = wb_refs[2 * l + 1][...]
        pre = jnp.dot(act, w, preferred_element_type=jnp.float32) + b   # f32 acc + f32 bias
        # pre is exactly zero outside this layer's lane range, so summing the per-layer
        # results yields the packed slab with no cross-lane data movement.
        packed = pre if packed is None else packed + pre
        if l < num_layers - 1:
            act = jnp.maximum(pre, 0.0).astype(jnp.bfloat16)            # f32 ReLU (v5e VPU)
    out_ref[...] = packed                           # single lane-dense unmasked store


def init_dnn_fc_params(key, input_size_list, nodes_in_each_layer_list, num_classes):
    """Deterministic init mirroring nn.Linear default U(-1/sqrt(fan_in), +).

    Returns list of (w_t, b) with w_t shaped (in_features, out_features), f32.
    """
    in_features = 1
    for d in input_size_list:
        in_features *= d

    layer_sizes = []
    prev = in_features
    for n in nodes_in_each_layer_list:
        layer_sizes.append((prev, n))
        prev = n
    layer_sizes.append((prev, num_classes))  # output layer

    params = []
    for (fan_in, fan_out) in layer_sizes:
        key, kw, kb = jax.random.split(key, 3)
        bound = 1.0 / (fan_in ** 0.5)
        w_t = jax.random.uniform(kw, (fan_in, fan_out), jnp.float32, -bound, bound)
        b = jax.random.uniform(kb, (fan_out,), jnp.float32, -bound, bound)
        params.append((w_t, b))
    return params


def make_dnn_fc_forward(params, *, batch_tile: int = 1024):
    """Pad/cast/shift weights once; return a jitted fused forward: x -> (logits, layer_outs)."""
    num_layers = len(params)
    out_widths = tuple(int(w.shape[1]) for (w, _) in params)
    in_features = int(params[0][0].shape[0])

    # Packed-output layout: every layer's pre-activation gets a disjoint lane range.
    offsets = []
    off = 0
    for n in out_widths:
        offsets.append(off)
        off += n
    pack_width = _round_up(off, 128)     # = 128 for the default 784->64->32->10 net
    # NOTE: for very wide layer lists (sum of widths >> 128) this uniform pack width
    # adds some weight padding; at this module's typical sizes it is exactly optimal.

    # --- one-time parameter prep: bf16 weights, f32 biases, zero-padded & lane-shifted ---
    padded = []
    prev_off = 0                         # lane offset of the true inputs in the incoming act
    for l, (w_t, b) in enumerate(params):
        K, N = map(int, w_t.shape)
        Kp = in_features if l == 0 else pack_width    # layer-0 K stays 784 (full-dim block)
        col0 = offsets[l]
        wp = (jnp.zeros((Kp, pack_width), jnp.bfloat16)
              .at[prev_off:prev_off + K, col0:col0 + N].set(w_t.astype(jnp.bfloat16)))
        bp = (jnp.zeros((1, pack_width), jnp.float32)
              .at[0, col0:col0 + N].set(b.astype(jnp.float32)))
        padded.append((wp, bp))
        prev_off = col0

    weight_bytes = sum(int(wp.size) * 2 + int(bp.size) * 4 for wp, bp in padded)

    def forward(x):
        B = int(x.shape[0])
        x2 = x.reshape(B, -1)                         # torch.flatten(inp, 1): free metadata op
        if x2.dtype != jnp.float32 and x2.dtype != jnp.bfloat16:
            x2 = x2.astype(jnp.float32)
        assert x2.shape[1] == in_features
        x_item = jnp.dtype(x2.dtype).itemsize

        # Batch tile: multiple of 8, >= 2 grid steps when possible (v7x dual TensorCore),
        # capped at batch_tile for VMEM.
        TB = min(batch_tile, _round_up(max(1, -(-B // 2)), 8))
        TB = max(8, (TB // 8) * 8)

        # Only the batch axis is padded, only to a multiple of 8, and only when needed;
        # otherwise x goes straight into the kernel with no HBM copy.  Partial last grid
        # tiles (B8 % TB != 0) use masked writes; those rows are sliced away below.
        B8 = _round_up(B, 8)
        if B8 != B:
            x_in = jnp.zeros((B8, in_features), x2.dtype).at[:B, :].set(x2)
        else:
            x_in = x2

        grid = (pl.cdiv(B8, TB),)

        in_specs = [pl.BlockSpec((TB, in_features), lambda i: (i, 0))]
        flat_wb = []
        for (wp, bp) in padded:
            Kp = int(wp.shape[0])
            # Full-array blocks with constant index_map -> weights stay VMEM-resident.
            in_specs.append(pl.BlockSpec((Kp, pack_width), lambda i: (0, 0)))
            in_specs.append(pl.BlockSpec((1, pack_width), lambda i: (0, 0)))
            flat_wb.extend((wp, bp))

        out_shape = jax.ShapeDtypeStruct((B8, pack_width), jnp.float32)
        out_spec = pl.BlockSpec((TB, pack_width), lambda i: (i, 0))

        flops = sum(2 * B8 * int(wp.shape[0]) * int(wp.shape[1]) for wp, _ in padded)
        bytes_accessed = (B8 * in_features * x_item          # input, read once, no pad copy
                          + weight_bytes                      # bf16 weights + f32 biases
                          + B8 * pack_width * 4)              # single packed output slab

        # VMEM footprint: double-buffered x/out tiles + (double-buffered) resident weights.
        # Bump the scoped limit only if the tile actually needs it (v5e default is 16 MiB).
        vmem_est = 2 * TB * (in_features * x_item + pack_width * 4) + 2 * weight_bytes
        vmem_limit = None
        if vmem_est > 12 * 1024 * 1024:
            vmem_limit = min(vmem_est + (4 << 20), 100 * 1024 * 1024)

        out = pl.pallas_call(
            functools.partial(_mlp_kernel, num_layers=num_layers),
            out_shape=out_shape,
            grid=grid,
            in_specs=in_specs,
            out_specs=out_spec,
            compiler_params=pltpu.CompilerParams(
                dimension_semantics=("parallel",),
                vmem_limit_bytes=vmem_limit),
            cost_estimate=pl.CostEstimate(
                flops=flops, transcendentals=0, bytes_accessed=bytes_accessed),
        )(x_in, *flat_wb)

        # Unpack the slab: hidden pre-activations (linear_conv_outputs) + logits.
        layer_outs = [out[:B, offsets[l]:offsets[l] + out_widths[l]]
                      for l in range(num_layers - 1)]
        logits = out[:B, offsets[-1]:offsets[-1] + out_widths[-1]]
        return logits, layer_outs

    return jax.jit(forward)


def dnn_fc_forward_ref(x, params):
    """Pure-jnp reference using the same bf16-weight / f32-accumulate numerics."""
    prev = x.reshape(x.shape[0], -1).astype(jnp.float32)
    num_hidden = len(params) - 1
    layer_outs = []
    logits = None
    for i, (w_t, b) in enumerate(params):
        pre = jnp.dot(prev.astype(jnp.bfloat16), w_t.astype(jnp.bfloat16),
                      preferred_element_type=jnp.float32) + b.astype(jnp.float32)
        if i < num_hidden:
            layer_outs.append(pre)
            prev = jnp.maximum(pre, 0.0)
        else:
            logits = pre
    return logits, layer_outs


if __name__ == "__main__":
    key = jax.random.PRNGKey(0)
    k_in, k_par = jax.random.split(key)

    # Module defaults: input_size_list=[28, 28] -> 784 features, hidden [64, 32], 10 classes.
    input_size_list = [28, 28]
    nodes_in_each_layer_list = [64, 32]
    num_classes = 10

    params = init_dnn_fc_params(k_par, input_size_list, nodes_in_each_layer_list, num_classes)
    forward = make_dnn_fc_forward(params)

    # batch=2 exercises the pad-to-8 path; batch=16 exercises the no-copy path with 2 grid steps.
    for batch in (2, 16):
        kx = jax.random.fold_in(k_in, batch)
        x = jax.random.normal(kx, (batch, *input_size_list), jnp.float32)

        logits, layer_outs = forward(x)
        logits = jax.block_until_ready(logits)

        ref_logits, ref_outs = dnn_fc_forward_ref(x, params)
        assert logits.shape == (batch, num_classes)
        assert jnp.allclose(logits, ref_logits, atol=1e-3, rtol=1e-3)
        assert len(layer_outs) == len(ref_outs)
        for got, want in zip(layer_outs, ref_outs):
            assert got.shape == want.shape
            assert jnp.allclose(got, want, atol=1e-3, rtol=1e-3)

    print("KERNEL_OK")
</pallas_src>

<mosaic_0001>
module attributes {stable_mosaic.version = 11 : i64} {
  func.func @_mlp_kernel(%arg0: i32, %arg1: memref<8x784xf32, #tpu.memory_space<vmem>>, %arg2: memref<784x128xbf16, #tpu.memory_space<vmem>>, %arg3: memref<1x128xf32, #tpu.memory_space<vmem>>, %arg4: memref<128x128xbf16, #tpu.memory_space<vmem>>, %arg5: memref<1x128xf32, #tpu.memory_space<vmem>>, %arg6: memref<128x128xbf16, #tpu.memory_space<vmem>>, %arg7: memref<1x128xf32, #tpu.memory_space<vmem>>, %arg8: memref<8x128xf32, #tpu.memory_space<vmem>>) attributes {dimension_semantics = [#tpu.dimension_semantics<parallel>], iteration_bounds = array<i64: 1>, scalar_prefetch = 0 : i64, scratch_operands = 0 : i64, tpu.core_type = #tpu.core_type<tc>, window_params = [{transform_indices = @transform_0, window_bounds = array<i64: 8, 784>}, {pipeline_mode = #tpu.pipeline_mode<synchronous>, transform_indices = @transform_1, window_bounds = array<i64: 784, 128>}, {pipeline_mode = #tpu.pipeline_mode<synchronous>, transform_indices = @transform_2, window_bounds = array<i64: 1, 128>}, {pipeline_mode = #tpu.pipeline_mode<synchronous>, transform_indices = @transform_3, window_bounds = array<i64: 128, 128>}, {pipeline_mode = #tpu.pipeline_mode<synchronous>, transform_indices = @transform_4, window_bounds = array<i64: 1, 128>}, {pipeline_mode = #tpu.pipeline_mode<synchronous>, transform_indices = @transform_5, window_bounds = array<i64: 128, 128>}, {pipeline_mode = #tpu.pipeline_mode<synchronous>, transform_indices = @transform_6, window_bounds = array<i64: 1, 128>}, {transform_indices = @transform_7, window_bounds = array<i64: 8, 128>}]} {
    %c0 = arith.constant 0 : index
    %c0_0 = arith.constant 0 : index
    %0 = vector.load %arg1[%c0, %c0_0] : memref<8x784xf32, #tpu.memory_space<vmem>>, vector<8x784xf32>
    %1 = arith.truncf %0 : vector<8x784xf32> to vector<8x784xbf16>
    %c0_1 = arith.constant 0 : index
    %c0_2 = arith.constant 0 : index
    %2 = vector.load %arg2[%c0_1, %c0_2] : memref<784x128xbf16, #tpu.memory_space<vmem>>, vector<784x128xbf16>
    %c0_3 = arith.constant 0 : index
    %c0_4 = arith.constant 0 : index
    %3 = vector.load %arg3[%c0_3, %c0_4] : memref<1x128xf32, #tpu.memory_space<vmem>>, vector<1x128xf32>
    %cst = arith.constant dense<0.000000e+00> : vector<8x128xf32>
    %4 = tpu.matmul %1, %2, %cst {dimension_numbers = #tpu.dot_dimension_numbers<[1], [0], [0], [1], [0, 0, 1, 1], [], []>} : vector<8x784xbf16>, vector<784x128xbf16>, vector<8x128xf32> -> vector<8x128xf32>
    %5 = vector.broadcast %3 : vector<1x128xf32> to vector<8x128xf32>
    %6 = arith.addf %4, %5 : vector<8x128xf32>
    %cst_5 = arith.constant 0.000000e+00 : f32
    %7 = vector.broadcast %cst_5 : f32 to vector<8x128xf32>
    %8 = arith.maximumf %6, %7 : vector<8x128xf32>
    %9 = arith.truncf %8 : vector<8x128xf32> to vector<8x128xbf16>
    %c0_6 = arith.constant 0 : index
    %c0_7 = arith.constant 0 : index
    %10 = vector.load %arg4[%c0_6, %c0_7] : memref<128x128xbf16, #tpu.memory_space<vmem>>, vector<128x128xbf16>
    %c0_8 = arith.constant 0 : index
    %c0_9 = arith.constant 0 : index
    %11 = vector.load %arg5[%c0_8, %c0_9] : memref<1x128xf32, #tpu.memory_space<vmem>>, vector<1x128xf32>
    %cst_10 = arith.constant dense<0.000000e+00> : vector<8x128xf32>
    %12 = tpu.matmul %9, %10, %cst_10 {dimension_numbers = #tpu.dot_dimension_numbers<[1], [0], [0], [1], [0, 0, 1, 1], [], []>} : vector<8x128xbf16>, vector<128x128xbf16>, vector<8x128xf32> -> vector<8x128xf32>
    %13 = vector.broadcast %11 : vector<1x128xf32> to vector<8x128xf32>
    %14 = arith.addf %12, %13 : vector<8x128xf32>
    %15 = arith.addf %6, %14 : vector<8x128xf32>
    %cst_11 = arith.constant 0.000000e+00 : f32
    %16 = vector.broadcast %cst_11 : f32 to vector<8x128xf32>
    %17 = arith.maximumf %14, %16 : vector<8x128xf32>
    %18 = arith.truncf %17 : vector<8x128xf32> to vector<8x128xbf16>
    %c0_12 = arith.constant 0 : index
    %c0_13 = arith.constant 0 : index
    %19 = vector.load %arg6[%c0_12, %c0_13] : memref<128x128xbf16, #tpu.memory_space<vmem>>, vector<128x128xbf16>
    %c0_14 = arith.constant 0 : index
    %c0_15 = arith.constant 0 : index
    %20 = vector.load %arg7[%c0_14, %c0_15] : memref<1x128xf32, #tpu.memory_space<vmem>>, vector<1x128xf32>
    %cst_16 = arith.constant dense<0.000000e+00> : vector<8x128xf32>
    %21 = tpu.matmul %18, %19, %cst_16 {dimension_numbers = #tpu.dot_dimension_numbers<[1], [0], [0], [1], [0, 0, 1, 1], [], []>} : vector<8x128xbf16>, vector<128x128xbf16>, vector<8x128xf32> -> vector<8x128xf32>
    %22 = vector.broadcast %20 : vector<1x128xf32> to vector<8x128xf32>
    %23 = arith.addf %21, %22 : vector<8x128xf32>
    %24 = arith.addf %15, %23 : vector<8x128xf32>
    %c0_17 = arith.constant 0 : index
    %c0_18 = arith.constant 0 : index
    %25 = vector.load %arg8[%c0_17, %c0_18] : memref<8x128xf32, #tpu.memory_space<vmem>>, vector<8x128xf32>
    tpu.vector_store %arg8[%c0_17, %c0_18], %24 {strides = array<i32>} : memref<8x128xf32, #tpu.memory_space<vmem>>, vector<8x128xf32>,
    return
  }
  func.func @transform_0(%arg0: i32) -> (i32, i32) {
    %c0_i32 = arith.constant 0 : i32
    %c0_i32_0 = arith.constant 0 : i32
    return %arg0, %c0_i32 : i32, i32
  }
  func.func @transform_1(%arg0: i32) -> (i32, i32) {
    %c0_i32 = arith.constant 0 : i32
    %c0_i32_0 = arith.constant 0 : i32
    %c0_i32_1 = arith.constant 0 : i32
    return %c0_i32, %c0_i32_0 : i32, i32
  }
  func.func @transform_2(%arg0: i32) -> (i32, i32) {
    %c0_i32 = arith.constant 0 : i32
    %c0_i32_0 = arith.constant 0 : i32
    %c0_i32_1 = arith.constant 0 : i32
    return %c0_i32, %c0_i32_0 : i32, i32
  }
  func.func @transform_3(%arg0: i32) -> (i32, i32) {
    %c0_i32 = arith.constant 0 : i32
    %c0_i32_0 = arith.constant 0 : i32
    %c0_i32_1 = arith.constant 0 : i32
    return %c0_i32, %c0_i32_0 : i32, i32
  }
  func.func @transform_4(%arg0: i32) -> (i32, i32) {
    %c0_i32 = arith.constant 0 : i32
    %c0_i32_0 = arith.constant 0 : i32
    %c0_i32_1 = arith.constant 0 : i32
    return %c0_i32, %c0_i32_0 : i32, i32
  }
  func.func @transform_5(%arg0: i32) -> (i32, i32) {
    %c0_i32 = arith.constant 0 : i32
    %c0_i32_0 = arith.constant 0 : i32
    %c0_i32_1 = arith.constant 0 : i32
    return %c0_i32, %c0_i32_0 : i32, i32
  }
  func.func @transform_6(%arg0: i32) -> (i32, i32) {
    %c0_i32 = arith.constant 0 : i32
    %c0_i32_0 = arith.constant 0 : i32
    %c0_i32_1 = arith.constant 0 : i32
    return %c0_i32, %c0_i32_0 : i32, i32
  }
  func.func @transform_7(%arg0: i32) -> (i32, i32) {
    %c0_i32 = arith.constant 0 : i32
    %c0_i32_0 = arith.constant 0 : i32
    return %arg0, %c0_i32 : i32, i32
  }
}

</mosaic_0001>

<llo_original>
// kernel: forward.1
$region0: #{forward.1}
  #allocation0 [shape = 'u32[]', space=smem, size = 0x4, offset = 0x4, fixed_abs, tag = 'smem constant byte address 0x4 - core index']
  #allocation1 [shape = 'u32[72,128]{1,0:T(1,128)}', space=vmem, size = 0x9000, scoped, tag = 'internal scratch']
  %s0 = inlined_call_operand.vmem [shape: f32[8,784], index: 0, kind: input, shape index: {}]
  %s1 = inlined_call_operand.hbm [shape: bf16[784,128], index: 1, kind: input, shape index: {}]
  %s2 = inlined_call_operand.vmem [shape: f32[1,128], index: 2, kind: input, shape index: {}]
  %s3 = inlined_call_operand.vmem [shape: bf16[128,128], index: 3, kind: input, shape index: {}]
  %s4 = inlined_call_operand.vmem [shape: f32[1,128], index: 4, kind: input, shape index: {}]
  %s5 = inlined_call_operand.vmem [shape: bf16[128,128], index: 5, kind: input, shape index: {}]
  %s6 = inlined_call_operand.vmem [shape: f32[1,128], index: 6, kind: input, shape index: {}]
  %s7 = inlined_call_operand.vmem [shape: f32[8,128], index: 7, kind: output, shape index: {}]
  %s8 = sld [smem:[#allocation0]]
  $region42: #{forward.1} parent=0
    _
  %s10 = ssub.s32 1, %s8
  %s11 = scalar_select 0, %s10, %s8
  $region1: #{forward.1} parent=0
    #allocation2 [shape = 'u8[200704]{0}', space=vmem, size = 0x31000, scoped, tag = 'input window, operand 1, single buffered']
    #allocation3 [shape = 's32[1]{0}', space=sflag, size = 0x4, scoped, tag = 'scoped memory for forward.1']
    %12 = vsyncpa [#allocation3], 0
    // Predicated region
    $region2: #{forward.1} parent=1 // pred_check
      _
    $region3: #{forward.1} parent=1 // pred_check_branch
      %14 = sbr.rel (0) target = $region5
    $region4: #{forward.1} parent=1 // pred_region
      _
    $region5: #{forward.1} parent=1 // pred_fallthru
      _
    // Predicated region
    $region6: #{forward.1} parent=1 // pred_check
      _
    $region7: #{forward.1} parent=1 // pred_check_branch
      %16 = sbr.rel (0) target = $region9
    $region8: #{forward.1} parent=1 // pred_region
      %18 = vsyncadd [#allocation3], 0
      %s19 = sshll.u32 %s1, 4
      %s20 = int_to_ptr.hbm [resolvable:$true] %s19
      %s21 = sshll.u32 [#allocation2], 4
      %s22 = int_to_ptr.vmem [resolvable:$true] %s21
      %27 = dma.hbm_to_vmem [thread:$0]  %s20, 6272, %s22, [#allocation3], 64, 64, 4
    $region9: #{forward.1} parent=1 // pred_fallthru
      _
    // Predicated region
    $region10: #{forward.1} parent=1 // pred_check
      _
    $region11: #{forward.1} parent=1 // pred_check_branch
      %29 = sbr.rel (0) target = $region13
    $region12: #{forward.1} parent=1 // pred_region
      _
    $region13: #{forward.1} parent=1 // pred_fallthru
      _
    // Predicated region
    $region14: #{forward.1} parent=1 // pred_check
      _
    $region15: #{forward.1} parent=1 // pred_check_branch
      %31 = sbr.rel (0) target = $region17
    $region16: #{forward.1} parent=1 // pred_region
      _
    $region17: #{forward.1} parent=1 // pred_fallthru
      _
    // Predicated region
    $region18: #{forward.1} parent=1 // pred_check
      _
    $region19: #{forward.1} parent=1 // pred_check_branch
      %33 = sbr.rel (0) target = $region21
    $region20: #{forward.1} parent=1 // pred_region
      _
    $region21: #{forward.1} parent=1 // pred_fallthru
      _
    // Predicated region
    $region22: #{forward.1} parent=1 // pred_check
      _
    $region23: #{forward.1} parent=1 // pred_check_branch
      %35 = sbr.rel (0) target = $region25
    $region24: #{forward.1} parent=1 // pred_region
      _
    $region25: #{forward.1} parent=1 // pred_fallthru
      _
    // Predicated region
    $region26: #{forward.1} parent=1 // pred_check
      _
    $region27: #{forward.1} parent=1 // pred_check_branch
      %37 = sbr.rel (0) target = $region29
    $region28: #{forward.1} parent=1 // pred_region
      _
    $region29: #{forward.1} parent=1 // pred_fallthru
      _
    // Predicated region
    $region30: #{forward.1} parent=1 // pred_check
      _
    $region31: #{forward.1} parent=1 // pred_check_branch
      %39 = sbr.rel (0) target = $region33
    $region32: #{forward.1} parent=1 // pred_region
      %41 = dma.done [#allocation3], 6272
    $region33: #{forward.1} parent=1 // pred_fallthru
      _
    %v43 = vld [vmem:[%s0] sm:$0xff]
    %v44 = vld [vmem:[%s0 + $0x8] sm:$0xff]
    %v45 = vld [vmem:[%s0 + $0x10] sm:$0xff]
    %v46 = vld [vmem:[%s0 + $0x18] sm:$0xff]
    %v47 = vld [vmem:[%s0 + $0x20] sm:$0xff]
    %v48 = vld [vmem:[%s0 + $0x28] sm:$0xff]
    %v49 = vld [vmem:[%s0 + $0x30] sm:$0xff]
    %v50 = vpack.c.bf16 %v43, %v43
    %v51 = vpack.c.bf16 %v44, %v44
    %v52 = vpack.c.bf16 %v45, %v45
    %v53 = vpack.c.bf16 %v46, %v46
    %v54 = vpack.c.bf16 %v47, %v47
    %v55 = vpack.c.bf16 %v48, %v48
    %v56 = vpack.c.bf16 %v49, %v49
    %v57 = vld [vmem:[#allocation2] sm:$0xf]
    %v58 = vld [vmem:[#allocation2 + $0x4] sm:$0xf]
    %v59 = vld [vmem:[#allocation2 + $0x8] sm:$0xf]
    %v60 = vld [vmem:[#allocation2 + $0xc] sm:$0xf]
    %v61 = vld [vmem:[#allocation2 + $0x10] sm:$0xf]
    %v62 = vld [vmem:[#allocation2 + $0x14] sm:$0xf]
    %v63 = vld [vmem:[#allocation2 + $0x18] sm:$0xf]
    %v64 = vld [vmem:[#allocation2 + $0x1c] sm:$0xf]
    %v65 = vld [vmem:[#allocation2 + $0x20] sm:$0xf]
    %v66 = vld [vmem:[#allocation2 + $0x24] sm:$0xf]
    %v67 = vld [vmem:[#allocation2 + $0x28] sm:$0xf]
    %v68 = vld [vmem:[#allocation2 + $0x2c] sm:$0xf]
    %v69 = vld [vmem:[#allocation2 + $0x30] sm:$0xf]
    %v70 = vld [vmem:[#allocation2 + $0x34] sm:$0xf]
    %v71 = vld [vmem:[#allocation2 + $0x38] sm:$0xf]
    %v72 = vld [vmem:[#allocation2 + $0x3c] sm:$0xf]
    %v73 = vld [vmem:[#allocation2 + $0x40] sm:$0xf]
    %v74 = vld [vmem:[#allocation2 + $0x44] sm:$0xf]
    %v75 = vld [vmem:[#allocation2 + $0x48] sm:$0xf]
    %v76 = vld [vmem:[#allocation2 + $0x4c] sm:$0xf]
    %v77 = vld [vmem:[#allocation2 + $0x50] sm:$0xf]
    %v78 = vld [vmem:[#allocation2 + $0x54] sm:$0xf]
    %v79 = vld [vmem:[#allocation2 + $0x58] sm:$0xf]
    %v80 = vld [vmem:[#allocation2 + $0x5c] sm:$0xf]
    %v81 = vld [vmem:[#allocation2 + $0x60] sm:$0xf]
    %v82 = vld [vmem:[#allocation2 + $0x64] sm:$0xf]
    %v83 = vld [vmem:[#allocation2 + $0x68] sm:$0xf]
    %v84 = vld [vmem:[#allocation2 + $0x6c] sm:$0xf]
    %v85 = vld [vmem:[#allocation2 + $0x70] sm:$0xf]
    %v86 = vld [vmem:[#allocation2 + $0x74] sm:$0xf]
    %v87 = vld [vmem:[#allocation2 + $0x78] sm:$0xf]
    %v88 = vld [vmem:[#allocation2 + $0x7c] sm:$0xf]
    %v89 = vld [vmem:[#allocation2 + $0x80] sm:$0xf]
    %v90 = vld [vmem:[#allocation2 + $0x84] sm:$0xf]
    %v91 = vld [vmem:[#allocation2 + $0x88] sm:$0xf]
    %v92 = vld [vmem:[#allocation2 + $0x8c] sm:$0xf]
    %v93 = vld [vmem:[#allocation2 + $0x90] sm:$0xf]
    %v94 = vld [vmem:[#allocation2 + $0x94] sm:$0xf]
    %v95 = vld [vmem:[#allocation2 + $0x98] sm:$0xf]
    %v96 = vld [vmem:[#allocation2 + $0x9c] sm:$0xf]
    %v97 = vld [vmem:[#allocation2 + $0xa0] sm:$0xf]
    %v98 = vld [vmem:[#allocation2 + $0xa4] sm:$0xf]
    %v99 = vld [vmem:[#allocation2 + $0xa8] sm:$0xf]
    %v100 = vld [vmem:[#allocation2 + $0xac] sm:$0xf]
    %v101 = vld [vmem:[#allocation2 + $0xb0] sm:$0xf]
    %v102 = vld [vmem:[#allocation2 + $0xb4] sm:$0xf]
    %v103 = vld [vmem:[#allocation2 + $0xb8] sm:$0xf]
    %v104 = vld [vmem:[#allocation2 + $0xbc] sm:$0xf]
    %v105 = vld [vmem:[#allocation2 + $0xc0] sm:$0xf]
    %v106 = vld [vmem:[#allocation2 + $0xc4] sm:$0xf]
    %v107 = vld [vmem:[#allocation2 + $0xc8] sm:$0xf]
    %v108 = vld [vmem:[#allocation2 + $0xcc] sm:$0xf]
    %v109 = vld [vmem:[#allocation2 + $0xd0] sm:$0xf]
    %v110 = vld [vmem:[#allocation2 + $0xd4] sm:$0xf]
    %v111 = vld [vmem:[#allocation2 + $0xd8] sm:$0xf]
    %v112 = vld [vmem:[#allocation2 + $0xdc] sm:$0xf]
    %v113 = vld [vmem:[#allocation2 + $0xe0] sm:$0xf]
    %v114 = vld [vmem:[#allocation2 + $0xe4] sm:$0xf]
    %v115 = vld [vmem:[#allocation2 + $0xe8] sm:$0xf]
    %v116 = vld [vmem:[#allocation2 + $0xec] sm:$0xf]
    %v117 = vld [vmem:[#allocation2 + $0xf0] sm:$0xf]
    %v118 = vld [vmem:[#allocation2 + $0xf4] sm:$0xf]
    %v119 = vld [vmem:[#allocation2 + $0xf8] sm:$0xf]
    %v120 = vld [vmem:[#allocation2 + $0xfc] sm:$0xf]
    %v121 = vld [vmem:[#allocation2 + $0x100] sm:$0xf]
    %v122 = vld [vmem:[#allocation2 + $0x104] sm:$0xf]
    %v123 = vld [vmem:[#allocation2 + $0x108] sm:$0xf]
    %v124 = vld [vmem:[#allocation2 + $0x10c] sm:$0xf]
    %v125 = vld [vmem:[#allocation2 + $0x110] sm:$0xf]
    %v126 = vld [vmem:[#allocation2 + $0x114] sm:$0xf]
    %v127 = vld [vmem:[#allocation2 + $0x118] sm:$0xf]
    %v128 = vld [vmem:[#allocation2 + $0x11c] sm:$0xf]
    %v129 = vld [vmem:[#allocation2 + $0x120] sm:$0xf]
    %v130 = vld [vmem:[#allocation2 + $0x124] sm:$0xf]
    %v131 = vld [vmem:[#allocation2 + $0x128] sm:$0xf]
    %v132 = vld [vmem:[#allocation2 + $0x12c] sm:$0xf]
    %v133 = vld [vmem:[#allocation2 + $0x130] sm:$0xf]
    %v134 = vld [vmem:[#allocation2 + $0x134] sm:$0xf]
    %v135 = vld [vmem:[#allocation2 + $0x138] sm:$0xf]
    %v136 = vld [vmem:[#allocation2 + $0x13c] sm:$0xf]
    %v137 = vld [vmem:[#allocation2 + $0x140] sm:$0xf]
    %v138 = vld [vmem:[#allocation2 + $0x144] sm:$0xf]
    %v139 = vld [vmem:[#allocation2 + $0x148] sm:$0xf]
    %v140 = vld [vmem:[#allocation2 + $0x14c] sm:$0xf]
    %v141 = vld [vmem:[#allocation2 + $0x150] sm:$0xf]
    %v142 = vld [vmem:[#allocation2 + $0x154] sm:$0xf]
    %v143 = vld [vmem:[#allocation2 + $0x158] sm:$0xf]
    %v144 = vld [vmem:[#allocation2 + $0x15c] sm:$0xf]
    %v145 = vld [vmem:[#allocation2 + $0x160] sm:$0xf]
    %v146 = vld [vmem:[#allocation2 + $0x164] sm:$0xf]
    %v147 = vld [vmem:[#allocation2 + $0x168] sm:$0xf]
    %v148 = vld [vmem:[#allocation2 + $0x16c] sm:$0xf]
    %v149 = vld [vmem:[#allocation2 + $0x170] sm:$0xf]
    %v150 = vld [vmem:[#allocation2 + $0x174] sm:$0xf]
    %v151 = vld [vmem:[#allocation2 + $0x178] sm:$0xf]
    %v152 = vld [vmem:[#allocation2 + $0x17c] sm:$0xf]
    %v153 = vld [vmem:[#allocation2 + $0x180] sm:$0xf]
    %v154 = vld [vmem:[#allocation2 + $0x184] sm:$0xf]
    %v155 = vld [vmem:[%s2] sm:$0x1]
    %v157 = vperm.slane %v155, 0
    %v257 = vunpack.c.l.b16 %v57
    %v258 = vunpack.c.l.b16 %v58
    %v259 = vunpack.c.l.b16 %v59
    %v260 = vunpack.c.l.b16 %v60
    %v261 = vunpack.c.l.b16 %v61
    %v262 = vunpack.c.l.b16 %v62
    %v263 = vunpack.c.l.b16 %v63
    %v264 = vunpack.c.l.b16 %v64
    %v265 = vunpack.c.l.b16 %v65
    %v266 = vunpack.c.l.b16 %v66
    %v267 = vunpack.c.l.b16 %v67
    %v268 = vunpack.c.l.b16 %v68
    %v269 = vunpack.c.l.b16 %v69
    %v270 = vunpack.c.l.b16 %v70
    %v271 = vunpack.c.l.b16 %v71
    %v272 = vunpack.c.l.b16 %v72
    %v273 = vunpack.c.l.b16 %v73
    %v274 = vunpack.c.l.b16 %v74
    %v275 = vunpack.c.l.b16 %v75
    %v276 = vunpack.c.l.b16 %v76
    %v277 = vunpack.c.l.b16 %v77
    %v278 = vunpack.c.l.b16 %v78
    %v279 = vunpack.c.l.b16 %v79
    %v280 = vunpack.c.l.b16 %v80
    %v281 = vunpack.c.l.b16 %v81
    %v282 = vunpack.c.l.b16 %v82
    %v283 = vunpack.c.l.b16 %v83
    %v284 = vunpack.c.l.b16 %v84
    %v285 = vunpack.c.l.b16 %v85
    %v286 = vunpack.c.l.b16 %v86
    %v287 = vunpack.c.l.b16 %v87
    %v288 = vunpack.c.l.b16 %v88
    %v289 = vunpack.c.l.b16 %v89
    %v290 = vunpack.c.l.b16 %v90
    %v291 = vunpack.c.l.b16 %v91
    %v292 = vunpack.c.l.b16 %v92
    %v293 = vunpack.c.l.b16 %v93
    %v294 = vunpack.c.l.b16 %v94
    %v295 = vunpack.c.l.b16 %v95
    %v296 = vunpack.c.l.b16 %v96
    %v297 = vunpack.c.l.b16 %v97
    %v298 = vunpack.c.l.b16 %v98
    %v299 = vunpack.c.l.b16 %v99
    %v300 = vunpack.c.l.b16 %v100
    %v301 = vunpack.c.l.b16 %v101
    %v302 = vunpack.c.l.b16 %v102
    %v303 = vunpack.c.l.b16 %v103
    %v304 = vunpack.c.l.b16 %v104
    %v305 = vunpack.c.l.b16 %v105
    %v306 = vunpack.c.l.b16 %v106
    %v307 = vunpack.c.l.b16 %v107
    %v308 = vunpack.c.l.b16 %v108
    %v309 = vunpack.c.l.b16 %v109
    %v310 = vunpack.c.l.b16 %v110
    %v311 = vunpack.c.l.b16 %v111
    %v312 = vunpack.c.l.b16 %v112
    %v313 = vunpack.c.l.b16 %v113
    %v314 = vunpack.c.l.b16 %v114
    %v315 = vunpack.c.l.b16 %v115
    %v316 = vunpack.c.l.b16 %v116
    %v317 = vunpack.c.l.b16 %v117
    %v318 = vunpack.c.l.b16 %v118
    %v319 = vunpack.c.l.b16 %v119
    %v320 = vunpack.c.l.b16 %v120
    %v321 = vunpack.c.l.b16 %v121
    %v322 = vunpack.c.l.b16 %v122
    %v323 = vunpack.c.l.b16 %v123
    %v324 = vunpack.c.l.b16 %v124
    %v325 = vunpack.c.l.b16 %v125
    %v326 = vunpack.c.l.b16 %v126
    %v327 = vunpack.c.l.b16 %v127
    %v328 = vunpack.c.l.b16 %v128
    %v329 = vunpack.c.l.b16 %v129
    %v330 = vunpack.c.l.b16 %v130
    %v331 = vunpack.c.l.b16 %v131
    %v332 = vunpack.c.l.b16 %v132
    %v333 = vunpack.c.l.b16 %v133
    %v334 = vunpack.c.l.b16 %v134
    %v335 = vunpack.c.l.b16 %v135
    %v336 = vunpack.c.l.b16 %v136
    %v337 = vunpack.c.l.b16 %v137
    %v338 = vunpack.c.l.b16 %v138
    %v339 = vunpack.c.l.b16 %v139
    %v340 = vunpack.c.l.b16 %v140
    %v341 = vunpack.c.l.b16 %v141
    %v342 = vunpack.c.l.b16 %v142
    %v343 = vunpack.c.l.b16 %v143
    %v344 = vunpack.c.l.b16 %v144
    %v345 = vunpack.c.l.b16 %v145
    %v346 = vunpack.c.l.b16 %v146
    %v347 = vunpack.c.l.b16 %v147
    %v348 = vunpack.c.l.b16 %v148
    %v349 = vunpack.c.l.b16 %v149
    %v350 = vunpack.c.l.b16 %v150
    %v351 = vunpack.c.l.b16 %v151
    %v352 = vunpack.c.l.b16 %v152
    %v353 = vunpack.c.l.b16 %v153
    %v354 = vunpack.c.l.b16 %v154
    %v355 = vpack.c.b16 %v258, %v257
    %v356 = vpack.c.b16 %v260, %v259
    %v357 = vpack.c.b16 %v262, %v261
    %v358 = vpack.c.b16 %v264, %v263
    %v359 = vpack.c.b16 %v266, %v265
    %v360 = vpack.c.b16 %v268, %v267
    %v361 = vpack.c.b16 %v270, %v269
    %v362 = vpack.c.b16 %v272, %v271
    %v363 = vpack.c.b16 %v274, %v273
    %v364 = vpack.c.b16 %v276, %v275
    %v365 = vpack.c.b16 %v278, %v277
    %v366 = vpack.c.b16 %v280, %v279
    %v367 = vpack.c.b16 %v282, %v281
    %v368 = vpack.c.b16 %v284, %v283
    %v369 = vpack.c.b16 %v286, %v285
    %v370 = vpack.c.b16 %v288, %v287
    %v371 = vpack.c.b16 %v290, %v289
    %v372 = vpack.c.b16 %v292, %v291
    %v373 = vpack.c.b16 %v294, %v293
    %v374 = vpack.c.b16 %v296, %v295
    %v375 = vpack.c.b16 %v298, %v297
    %v376 = vpack.c.b16 %v300, %v299
    %v377 = vpack.c.b16 %v302, %v301
    %v378 = vpack.c.b16 %v304, %v303
    %v379 = vpack.c.b16 %v306, %v305
    %v380 = vpack.c.b16 %v308, %v307
    %v381 = vpack.c.b16 %v310, %v309
    %v382 = vpack.c.b16 %v312, %v311
    %v383 = vpack.c.b16 %v314, %v313
    %v384 = vpack.c.b16 %v316, %v315
    %v385 = vpack.c.b16 %v318, %v317
    %v386 = vpack.c.b16 %v320, %v319
    %v387 = vpack.c.b16 %v322, %v321
    %v388 = vpack.c.b16 %v324, %v323
    %v389 = vpack.c.b16 %v326, %v325
    %v390 = vpack.c.b16 %v328, %v327
    %v391 = vpack.c.b16 %v330, %v329
    %v392 = vpack.c.b16 %v332, %v331
    %v393 = vpack.c.b16 %v334, %v333
    %v394 = vpack.c.b16 %v336, %v335
    %v395 = vpack.c.b16 %v338, %v337
    %v396 = vpack.c.b16 %v340, %v339
    %v397 = vpack.c.b16 %v342, %v341
    %v398 = vpack.c.b16 %v344, %v343
    %v399 = vpack.c.b16 %v346, %v345
    %v400 = vpack.c.b16 %v348, %v347
    %v401 = vpack.c.b16 %v350, %v349
    %v402 = vpack.c.b16 %v352, %v351
    %v403 = vpack.c.b16 %v354, %v353
    %vm453 = vcmask 130048
    %v455 = vsel %vm453, %v56, 0
    %457 = vmatpush.bf16.msra.mxu0 %v362
    %458 = vmatpush.bf16.msra.mxu0 %v361
    %459 = vmatpush.bf16.msra.mxu0 %v360
    %460 = vmatpush.bf16.msra.mxu0 %v359
    %461 = vmatpush.bf16.msra.mxu0 %v358
    %462 = vmatpush.bf16.msra.mxu0 %v357
    %463 = vmatpush.bf16.msra.mxu0 %v356
    %464 = vmatpush.bf16.msra.mxu0 %v355
    %465 = vmatmul.bf16.gmra.mxu0 %v50
    %v466 = vpop.f32.mrf.mxu0
    %v467 = vadd.f32 %v157, %v466
    %v468 = vpop.f32.mrf.mxu0
    %469 = vdwg.mxu0
    %470 = vmatpush.bf16.msra.mxu0 %v370
    %471 = vmatpush.bf16.msra.mxu0 %v369
    %472 = vmatpush.bf16.msra.mxu0 %v368
    %473 = vmatpush.bf16.msra.mxu0 %v367
    %474 = vmatpush.bf16.msra.mxu0 %v366
    %475 = vmatpush.bf16.msra.mxu0 %v365
    %476 = vmatpush.bf16.msra.mxu0 %v364
    %477 = vmatpush.bf16.msra.mxu0 %v363
    %478 = vmatmul.bf16.gmra.mxu0 %v51
    %v479 = vpop.f32.mrf.mxu0
    %v480 = vadd.f32 %v467, %v479
    %v481 = vpop.f32.mrf.mxu0
    %482 = vdwg.mxu0
    %483 = vmatpush.bf16.msra.mxu0 %v378
    %484 = vmatpush.bf16.msra.mxu0 %v377
    %485 = vmatpush.bf16.msra.mxu0 %v376
    %486 = vmatpush.bf16.msra.mxu0 %v375
    %487 = vmatpush.bf16.msra.mxu0 %v374
    %488 = vmatpush.bf16.msra.mxu0 %v373
    %489 = vmatpush.bf16.msra.mxu0 %v372
    %490 = vmatpush.bf16.msra.mxu0 %v371
    %491 = vmatmul.bf16.gmra.mxu0 %v52
    %v492 = vpop.f32.mrf.mxu0
    %v493 = vadd.f32 %v480, %v492
    %v494 = vpop.f32.mrf.mxu0
    %495 = vdwg.mxu0
    %496 = vmatpush.bf16.msra.mxu0 %v386
    %497 = vmatpush.bf16.msra.mxu0 %v385
    %498 = vmatpush.bf16.msra.mxu0 %v384
    %499 = vmatpush.bf16.msra.mxu0 %v383
    %500 = vmatpush.bf16.msra.mxu0 %v382
    %501 = vmatpush.bf16.msra.mxu0 %v381
    %502 = vmatpush.bf16.msra.mxu0 %v380
    %503 = vmatpush.bf16.msra.mxu0 %v379
    %504 = vmatmul.bf16.gmra.mxu0 %v53
    %v505 = vpop.f32.mrf.mxu0
    %v506 = vadd.f32 %v493, %v505
    %v507 = vpop.f32.mrf.mxu0
    %508 = vdwg.mxu0
    %509 = vmatpush.bf16.msra.mxu0 %v394
    %510 = vmatpush.bf16.msra.mxu0 %v393
    %511 = vmatpush.bf16.msra.mxu0 %v392
    %512 = vmatpush.bf16.msra.mxu0 %v391
    %513 = vmatpush.bf16.msra.mxu0 %v390
    %514 = vmatpush.bf16.msra.mxu0 %v389
    %515 = vmatpush.bf16.msra.mxu0 %v388
    %516 = vmatpush.bf16.msra.mxu0 %v387
    %517 = vmatmul.bf16.gmra.mxu0 %v54
    %v518 = vpop.f32.mrf.mxu0
    %v519 = vadd.f32 %v506, %v518
    %v520 = vpop.f32.mrf.mxu0
    %521 = vdwg.mxu0
    %522 = vmatpush.bf16.msra.mxu0 %v402
    %523 = vmatpush.bf16.msra.mxu0 %v401
    %524 = vmatpush.bf16.msra.mxu0 %v400
    %525 = vmatpush.bf16.msra.mxu0 %v399
    %526 = vmatpush.bf16.msra.mxu0 %v398
    %527 = vmatpush.bf16.msra.mxu0 %v397
    %528 = vmatpush.bf16.msra.mxu0 %v396
    %529 = vmatpush.bf16.msra.mxu0 %v395
    %530 = vmatmul.bf16.gmra.mxu0 %v55
    %v531 = vpop.f32.mrf.mxu0
    %v532 = vadd.f32 %v519, %v531
    %v533 = vpop.f32.mrf.mxu0
    %534 = vdwg.mxu0
    %535 = vmatpush.bf16.msra.mxu0 0
    %536 = vmatpush.bf16.msra.mxu0 0
    %537 = vmatpush.bf16.msra.mxu0 0
    %538 = vmatpush.bf16.msra.mxu0 0
    %539 = vmatpush.bf16.msra.mxu0 0
    %540 = vmatpush.bf16.msra.mxu0 0
    %541 = vmatpush.bf16.msra.mxu0 0
    %542 = vmatpush.bf16.msra.mxu0 %v403
    %543 = vmatmul.bf16.gmra.mxu0 %v455
    %v544 = vpop.f32.mrf.mxu0
    %v545 = vadd.f32 %v532, %v544
    %v546 = vpop.f32.mrf.mxu0
    %547 = vdwg.mxu0
    %v548 = vmax.f32 %v545, 0.0
    %v549 = vpack.c.bf16 %v548, %v548
    %v550 = vld [vmem:[%s3] sm:$0xf]
    %v551 = vld [vmem:[%s3 + $0x4] sm:$0xf]
    %v552 = vld [vmem:[%s3 + $0x8] sm:$0xf]
    %v553 = vld [vmem:[%s3 + $0xc] sm:$0xf]
    %v554 = vld [vmem:[%s3 + $0x10] sm:$0xf]
    %v555 = vld [vmem:[%s3 + $0x14] sm:$0xf]
    %v556 = vld [vmem:[%s3 + $0x18] sm:$0xf]
    %v557 = vld [vmem:[%s3 + $0x1c] sm:$0xf]
    %v558 = vld [vmem:[%s3 + $0x20] sm:$0xf]
    %v559 = vld [vmem:[%s3 + $0x24] sm:$0xf]
    %v560 = vld [vmem:[%s3 + $0x28] sm:$0xf]
    %v561 = vld [vmem:[%s3 + $0x2c] sm:$0xf]
    %v562 = vld [vmem:[%s3 + $0x30] sm:$0xf]
    %v563 = vld [vmem:[%s3 + $0x34] sm:$0xf]
    %v564 = vld [vmem:[%s3 + $0x38] sm:$0xf]
    %v565 = vld [vmem:[%s3 + $0x3c] sm:$0xf]
    %v566 = vld [vmem:[%s4] sm:$0x1]
    %v568 = vperm.slane %v566, 0
    %v586 = vunpack.c.l.b16 %v550
    %v587 = vunpack.c.l.b16 %v551
    %v588 = vunpack.c.l.b16 %v552
    %v589 = vunpack.c.l.b16 %v553
    %v590 = vunpack.c.l.b16 %v554
    %v591 = vunpack.c.l.b16 %v555
    %v592 = vunpack.c.l.b16 %v556
    %v593 = vunpack.c.l.b16 %v557
    %v594 = vunpack.c.l.b16 %v558
    %v595 = vunpack.c.l.b16 %v559
    %v596 = vunpack.c.l.b16 %v560
    %v597 = vunpack.c.l.b16 %v561
    %v598 = vunpack.c.l.b16 %v562
    %v599 = vunpack.c.l.b16 %v563
    %v600 = vunpack.c.l.b16 %v564
    %v601 = vunpack.c.l.b16 %v565
    %v602 = vpack.c.b16 %v587, %v586
    %v603 = vpack.c.b16 %v589, %v588
    %v604 = vpack.c.b16 %v591, %v590
    %v605 = vpack.c.b16 %v593, %v592
    %v606 = vpack.c.b16 %v595, %v594
    %v607 = vpack.c.b16 %v597, %v596
    %v608 = vpack.c.b16 %v599, %v598
    %v609 = vpack.c.b16 %v601, %v600
    %618 = vmatpush.bf16.msra.mxu0 %v609
    %619 = vmatpush.bf16.msra.mxu0 %v608
    %620 = vmatpush.bf16.msra.mxu0 %v607
    %621 = vmatpush.bf16.msra.mxu0 %v606
    %622 = vmatpush.bf16.msra.mxu0 %v605
    %623 = vmatpush.bf16.msra.mxu0 %v604
    %624 = vmatpush.bf16.msra.mxu0 %v603
    %625 = vmatpush.bf16.msra.mxu0 %v602
    %626 = vmatmul.bf16.gmra.mxu0 %v549
    %v627 = vpop.f32.mrf.mxu0
    %v628 = vadd.f32 %v568, %v627
    %v629 = vpop.f32.mrf.mxu0
    %630 = vdwg.mxu0
    %v631 = vadd.f32 %v545, %v628
    %v632 = vmax.f32 %v628, 0.0
    %v633 = vpack.c.bf16 %v632, %v632
    %v634 = vld [vmem:[%s5] sm:$0xf]
    %v635 = vld [vmem:[%s5 + $0x4] sm:$0xf]
    %v636 = vld [vmem:[%s5 + $0x8] sm:$0xf]
    %v637 = vld [vmem:[%s5 + $0xc] sm:$0xf]
    %v638 = vld [vmem:[%s5 + $0x10] sm:$0xf]
    %v639 = vld [vmem:[%s5 + $0x14] sm:$0xf]
    %v640 = vld [vmem:[%s5 + $0x18] sm:$0xf]
    %v641 = vld [vmem:[%s5 + $0x1c] sm:$0xf]
    %v642 = vld [vmem:[%s5 + $0x20] sm:$0xf]
    %v643 = vld [vmem:[%s5 + $0x24] sm:$0xf]
    %v644 = vld [vmem:[%s5 + $0x28] sm:$0xf]
    %v645 = vld [vmem:[%s5 + $0x2c] sm:$0xf]
    %v646 = vld [vmem:[%s5 + $0x30] sm:$0xf]
    %v647 = vld [vmem:[%s5 + $0x34] sm:$0xf]
    %v648 = vld [vmem:[%s5 + $0x38] sm:$0xf]
    %v649 = vld [vmem:[%s5 + $0x3c] sm:$0xf]
    %v650 = vld [vmem:[%s6] sm:$0x1]
    %v652 = vperm.slane %v650, 0
    %v670 = vunpack.c.l.b16 %v634
    %v671 = vunpack.c.l.b16 %v635
    %v672 = vunpack.c.l.b16 %v636
    %v673 = vunpack.c.l.b16 %v637
    %v674 = vunpack.c.l.b16 %v638
    %v675 = vunpack.c.l.b16 %v639
    %v676 = vunpack.c.l.b16 %v640
    %v677 = vunpack.c.l.b16 %v641
    %v678 = vunpack.c.l.b16 %v642
    %v679 = vunpack.c.l.b16 %v643
    %v680 = vunpack.c.l.b16 %v644
    %v681 = vunpack.c.l.b16 %v645
    %v682 = vunpack.c.l.b16 %v646
    %v683 = vunpack.c.l.b16 %v647
    %v684 = vunpack.c.l.b16 %v648
    %v685 = vunpack.c.l.b16 %v649
    %v686 = vpack.c.b16 %v671, %v670
    %v687 = vpack.c.b16 %v673, %v672
    %v688 = vpack.c.b16 %v675, %v674
    %v689 = vpack.c.b16 %v677, %v676
    %v690 = vpack.c.b16 %v679, %v678
    %v691 = vpack.c.b16 %v681, %v680
    %v692 = vpack.c.b16 %v683, %v682
    %v693 = vpack.c.b16 %v685, %v684
    %702 = vmatpush.bf16.msra.mxu0 %v693
    %703 = vmatpush.bf16.msra.mxu0 %v692
    %704 = vmatpush.bf16.msra.mxu0 %v691
    %705 = vmatpush.bf16.msra.mxu0 %v690
    %706 = vmatpush.bf16.msra.mxu0 %v689
    %707 = vmatpush.bf16.msra.mxu0 %v688
    %708 = vmatpush.bf16.msra.mxu0 %v687
    %709 = vmatpush.bf16.msra.mxu0 %v686
    %710 = vmatmul.bf16.gmra.mxu0 %v633
    %v711 = vpop.f32.mrf.mxu0
    %v712 = vadd.f32 %v652, %v711
    %v713 = vpop.f32.mrf.mxu0
    %714 = vdwg.mxu0
    %v715 = vadd.f32 %v631, %v712
    %716 = vst [vmem:[%s7] sm:$0xff] %v715
    // Predicated region
    $region34: #{forward.1} parent=1 // pred_check
      _
    $region35: #{forward.1} parent=1 // pred_check_branch
      %718 = sbr.rel (0) target = $region37
    $region36: #{forward.1} parent=1 // pred_region
      _
    $region37: #{forward.1} parent=1 // pred_fallthru
      _
    // Predicated region
    $region38: #{forward.1} parent=1 // pred_check
      _
    $region39: #{forward.1} parent=1 // pred_check_branch
      %720 = sbr.rel (0) target = $region41
    $region40: #{forward.1} parent=1 // pred_region
      _
    $region41: #{forward.1} parent=1 // pred_fallthru
      _
    %721 = vsyncpa [#allocation3], 1

</llo_original>
